<compile_context>
chip_gen: v7x
topology: tpu7x:2x2x1
jax: 0.10.0
libtpu: 0.0.40
codegen_flags: <defaults>
</compile_context>

<pallas_src>
import jax
import jax.numpy as jnp
from jax.experimental import pallas as pl
from jax.experimental.pallas import tpu as pltpu


def _cdiv(a: int, b: int) -> int:
    return -(-a // b)


def _round_up(n: int, m: int) -> int:
    return _cdiv(n, m) * m


def _num_tensorcores() -> int:
    """Best-effort TensorCore count of the local chip (v7x=2, v5e/v6e=1)."""
    try:
        info = pltpu.get_tpu_info()
        for name in ("num_cores", "num_tensorcores", "tensorcores_per_chip",
                     "cores_per_chip"):
            v = getattr(info, name, None)
            if v:
                return max(1, min(int(v), 4))
    except Exception:
        pass
    try:
        d = jax.devices()[0]
        for name in ("num_cores", "core_count"):
            v = getattr(d, name, None)
            if v:
                return max(1, min(int(v), 4))
    except Exception:
        pass
    return 1


def _choose_blocks(bsz, out_dim, in_dim, itemsize, num_cores,
                   target_bytes=4 << 20):
    """Pick (batch_tile, out_dim_tile).

    The streaming acts/out block (tb, to, in_dim) targets ~target_bytes so the
    kernel sits at the HBM roofline with 2-deep pipelining well inside scoped
    VMEM on every generation (incl. v7x's 64 MiB physical VMEM).
    """
    lane_row = max(in_dim * itemsize, 1)
    # Tile out_dim only when even an 8-row batch slab would blow the target.
    if out_dim > 8 and 8 * out_dim * lane_row > target_bytes:
        to = max(8, (target_bytes // (8 * lane_row)) // 8 * 8)
        to = min(to, out_dim)
    else:
        to = out_dim

    row_bytes = max(to * lane_row, 1)
    tb = max(8, (target_bytes // row_bytes) // 8 * 8)
    tb = min(tb, _round_up(bsz, 8))
    if tb > bsz:
        tb = bsz  # single full-batch block (leading dim needs no alignment)

    # Multi-TC chips (v7x): make the parallel batch axis split evenly across
    # cores -- a mem-bound kernel needs both TCs to reach full HBM bandwidth.
    if num_cores > 1 and bsz > 8:
        steps = _cdiv(bsz, tb)
        want = _round_up(max(steps, num_cores), num_cores)
        tb_mc = max(8, _round_up(_cdiv(bsz, want), 8))
        if tb_mc < tb:
            tb = tb_mc
        if tb > bsz:
            tb = bsz
    return tb, to


def _weighted_residual_kernel(x_ref, acts_ref, rw_ref, uw_ref, o_ref):
    # x_ref:    (tb, in_dim)            narrow tile, SiLU done here in f32
    # acts_ref: (tb, to, in_dim)        streaming block (native dtype)
    # rw_ref:   (to, in_dim)            residual weight, resident across batch
    # uw_ref:   (to, in_dim)            univariate weight, resident
    # o_ref:    (tb, to, in_dim)
    x = x_ref[...].astype(jnp.float32)
    silu_x = (x * jax.nn.sigmoid(x)).astype(o_ref.dtype)      # (tb, in_dim)
    # Fused FMA in the native output dtype (bf16 stays bf16 on v6e/v7x).
    out = silu_x[:, None, :] * rw_ref[...] + uw_ref[...] * acts_ref[...]
    o_ref[...] = out.astype(o_ref.dtype)


def weighted_residual(x, post_acts, residual_weight, univariate_weight,
                      *, block_batch=None, block_out=None):
    bsz, in_dim = x.shape
    _, out_dim, _ = post_acts.shape
    assert post_acts.shape == (bsz, out_dim, in_dim)
    assert residual_weight.shape == (out_dim, in_dim)
    assert univariate_weight.shape == (out_dim, in_dim)

    out_dtype = post_acts.dtype
    itemsize = jnp.dtype(out_dtype).itemsize

    # Cast the (tiny) weights up-front so no full-block upcast of acts is ever
    # materialized inside the kernel.
    residual_weight = residual_weight.astype(out_dtype)
    univariate_weight = univariate_weight.astype(out_dtype)

    tb, to = _choose_blocks(bsz, out_dim, in_dim, itemsize, _num_tensorcores())
    # Sanitize explicit overrides (sublane alignment / array bounds).
    if block_batch is not None:
        tb = min(_round_up(int(block_batch), 8), _round_up(bsz, 8))
        if tb > bsz:
            tb = bsz
    if block_out is not None:
        to = min(_round_up(int(block_out), 8), out_dim)

    nb = _cdiv(bsz, tb)
    no = _cdiv(out_dim, to)
    grid = (nb, no)

    # Scoped-VMEM budget: double-buffered acts + out blocks, x blocks, weights.
    acts_blk = tb * to * in_dim * itemsize
    x_blk = tb * in_dim * jnp.dtype(x.dtype).itemsize
    w_blk = to * in_dim * itemsize
    need = 4 * acts_blk + 2 * x_blk + 4 * w_blk
    vmem_limit = int(min(max(2 * need, 32 << 20), 64 << 20))

    total = bsz * out_dim * in_dim
    cost = pl.CostEstimate(
        flops=3 * total + 4 * bsz * in_dim,
        transcendentals=bsz * in_dim,
        bytes_accessed=(2 * total * itemsize
                        + bsz * in_dim * jnp.dtype(x.dtype).itemsize
                        + 2 * out_dim * in_dim * itemsize),
    )

    return pl.pallas_call(
        _weighted_residual_kernel,
        out_shape=jax.ShapeDtypeStruct((bsz, out_dim, in_dim), out_dtype),
        grid_spec=pltpu.PrefetchScalarGridSpec(
            num_scalar_prefetch=0,
            grid=grid,
            in_specs=[
                pl.BlockSpec((tb, in_dim), lambda b, o: (b, 0)),
                pl.BlockSpec((tb, to, in_dim), lambda b, o: (b, o, 0)),
                pl.BlockSpec((to, in_dim), lambda b, o: (o, 0)),
                pl.BlockSpec((to, in_dim), lambda b, o: (o, 0)),
            ],
            out_specs=pl.BlockSpec((tb, to, in_dim), lambda b, o: (b, o, 0)),
        ),
        compiler_params=pltpu.CompilerParams(
            dimension_semantics=("parallel", "parallel"),
            vmem_limit_bytes=vmem_limit,
        ),
        cost_estimate=cost,
    )(x, post_acts, residual_weight, univariate_weight)


if __name__ == "__main__":
    # Small shapes consistent with the module's forward contract.
    # bsz=20 is deliberately not a multiple of 8 to exercise the ragged
    # (un-padded) tail block path.
    bsz, in_dim, out_dim = 20, 128, 16
    residual_std = 0.1

    key = jax.random.PRNGKey(0)
    k_x, k_acts, k_rw = jax.random.split(key, 3)

    x = jax.random.normal(k_x, (bsz, in_dim), dtype=jnp.float32)
    post_acts = jax.random.normal(k_acts, (bsz, out_dim, in_dim), dtype=jnp.float32)

    # Deterministic parameter init matching the module's _initialization:
    #   residual_weight ~ N(0, residual_std), univariate_weight = ones.
    residual_weight = residual_std * jax.random.normal(
        k_rw, (out_dim, in_dim), dtype=jnp.float32)
    univariate_weight = jnp.ones((out_dim, in_dim), dtype=jnp.float32)

    # f32 path.
    out = weighted_residual(x, post_acts, residual_weight, univariate_weight)
    out = jax.block_until_ready(out)
    ref = residual_weight * jax.nn.silu(x[:, None, :]) + univariate_weight * post_acts
    assert out.shape == (bsz, out_dim, in_dim)
    assert jnp.allclose(out, ref, atol=1e-5, rtol=1e-5), "f32 mismatch vs reference"

    # bf16 path: the big-tile math stays bf16 inside the kernel.
    x16 = x.astype(jnp.bfloat16)
    acts16 = post_acts.astype(jnp.bfloat16)
    out16 = weighted_residual(x16, acts16, residual_weight, univariate_weight)
    out16 = jax.block_until_ready(out16)
    ref16 = (residual_weight * jax.nn.silu(x16.astype(jnp.float32))[:, None, :]
             + univariate_weight * acts16.astype(jnp.float32))
    assert out16.dtype == jnp.bfloat16
    assert jnp.allclose(out16.astype(jnp.float32), ref16, atol=1e-1, rtol=1e-1), \
        "bf16 mismatch vs reference"

    print("KERNEL_OK")
</pallas_src>

<mosaic_0001>
module attributes {stable_mosaic.version = 11 : i64} {
  func.func @_weighted_residual_kernel(%arg0: i32, %arg1: i32, %arg2: memref<20x128xf32, #tpu.memory_space<vmem>>, %arg3: memref<20x16x128xf32, #tpu.memory_space<vmem>>, %arg4: memref<16x128xf32, #tpu.memory_space<vmem>>, %arg5: memref<16x128xf32, #tpu.memory_space<vmem>>, %arg6: memref<20x16x128xf32, #tpu.memory_space<vmem>>) attributes {dimension_semantics = [#tpu.dimension_semantics<parallel>, #tpu.dimension_semantics<parallel>], iteration_bounds = array<i64: 1, 1>, scalar_prefetch = 0 : i64, scratch_operands = 0 : i64, tpu.core_type = #tpu.core_type<tc>, window_params = [{transform_indices = @transform_0, window_bounds = array<i64: 20, 128>}, {transform_indices = @transform_1, window_bounds = array<i64: 20, 16, 128>}, {transform_indices = @transform_2, window_bounds = array<i64: 16, 128>}, {transform_indices = @transform_3, window_bounds = array<i64: 16, 128>}, {transform_indices = @transform_4, window_bounds = array<i64: 20, 16, 128>}]} {
    %c0 = arith.constant 0 : index
    %c0_0 = arith.constant 0 : index
    %0 = vector.load %arg2[%c0, %c0_0] : memref<20x128xf32, #tpu.memory_space<vmem>>, vector<20x128xf32>
    %1 = arith.negf %0 : vector<20x128xf32>
    %2 = math.exp %1 : vector<20x128xf32>
    %cst = arith.constant 1.000000e+00 : f32
    %3 = vector.broadcast %cst : f32 to vector<20x128xf32>
    %4 = arith.addf %3, %2 : vector<20x128xf32>
    %5 = arith.divf %3, %4 : vector<20x128xf32>
    %6 = arith.mulf %0, %5 : vector<20x128xf32>
    %7 = vector.shape_cast %6 : vector<20x128xf32> to vector<20x1x128xf32>
    %c0_1 = arith.constant 0 : index
    %c0_2 = arith.constant 0 : index
    %8 = vector.load %arg4[%c0_1, %c0_2] : memref<16x128xf32, #tpu.memory_space<vmem>>, vector<16x128xf32>
    %9 = vector.shape_cast %8 : vector<16x128xf32> to vector<1x16x128xf32>
    %10 = vector.broadcast %7 : vector<20x1x128xf32> to vector<20x16x128xf32>
    %11 = vector.broadcast %9 : vector<1x16x128xf32> to vector<20x16x128xf32>
    %12 = arith.mulf %10, %11 : vector<20x16x128xf32>
    %c0_3 = arith.constant 0 : index
    %c0_4 = arith.constant 0 : index
    %13 = vector.load %arg5[%c0_3, %c0_4] : memref<16x128xf32, #tpu.memory_space<vmem>>, vector<16x128xf32>
    %c0_5 = arith.constant 0 : index
    %c0_6 = arith.constant 0 : index
    %c0_7 = arith.constant 0 : index
    %14 = vector.load %arg3[%c0_5, %c0_6, %c0_7] : memref<20x16x128xf32, #tpu.memory_space<vmem>>, vector<20x16x128xf32>
    %15 = vector.shape_cast %13 : vector<16x128xf32> to vector<1x16x128xf32>
    %16 = vector.broadcast %15 : vector<1x16x128xf32> to vector<20x16x128xf32>
    %17 = arith.mulf %16, %14 : vector<20x16x128xf32>
    %18 = arith.addf %12, %17 : vector<20x16x128xf32>
    %c0_8 = arith.constant 0 : index
    %c0_9 = arith.constant 0 : index
    %c0_10 = arith.constant 0 : index
    %19 = vector.load %arg6[%c0_8, %c0_9, %c0_10] : memref<20x16x128xf32, #tpu.memory_space<vmem>>, vector<20x16x128xf32>
    tpu.vector_store %arg6[%c0_8, %c0_9, %c0_10], %18 {strides = array<i32>} : memref<20x16x128xf32, #tpu.memory_space<vmem>>, vector<20x16x128xf32>,
    return
  }
  func.func @transform_0(%arg0: i32, %arg1: i32) -> (i32, i32) {
    %c0_i32 = arith.constant 0 : i32
    %c0_i32_0 = arith.constant 0 : i32
    return %arg0, %c0_i32 : i32, i32
  }
  func.func @transform_1(%arg0: i32, %arg1: i32) -> (i32, i32, i32) {
    %c0_i32 = arith.constant 0 : i32
    %c0_i32_0 = arith.constant 0 : i32
    return %arg0, %arg1, %c0_i32 : i32, i32, i32
  }
  func.func @transform_2(%arg0: i32, %arg1: i32) -> (i32, i32) {
    %c0_i32 = arith.constant 0 : i32
    %c0_i32_0 = arith.constant 0 : i32
    return %arg1, %c0_i32 : i32, i32
  }
  func.func @transform_3(%arg0: i32, %arg1: i32) -> (i32, i32) {
    %c0_i32 = arith.constant 0 : i32
    %c0_i32_0 = arith.constant 0 : i32
    return %arg1, %c0_i32 : i32, i32
  }
  func.func @transform_4(%arg0: i32, %arg1: i32) -> (i32, i32, i32) {
    %c0_i32 = arith.constant 0 : i32
    %c0_i32_0 = arith.constant 0 : i32
    return %arg0, %arg1, %c0_i32 : i32, i32, i32
  }
}

</mosaic_0001>

<llo_original>
// kernel: tpu_custom_call.1
$region0: #{tpu_custom_call.1}
  #allocation0 [shape = 'u32[]', space=smem, size = 0x4, offset = 0x4, fixed_abs, tag = 'smem constant byte address 0x4 - core index']
  #allocation1 [shape = 'u32[144,128]{1,0:T(1,128)}', space=vmem, size = 0x12000, scoped, tag = 'internal scratch']
  %s0 = inlined_call_operand.hbm [shape: f32[20,128], index: 0, kind: input, shape index: {}]
  %s1 = inlined_call_operand.hbm [shape: f32[20,16,128], index: 1, kind: input, shape index: {}]
  %s2 = inlined_call_operand.hbm [shape: f32[16,128], index: 2, kind: input, shape index: {}]
  %s3 = inlined_call_operand.hbm [shape: f32[16,128], index: 3, kind: input, shape index: {}]
  %s4 = inlined_call_operand.hbm [shape: f32[20,16,128], index: 4, kind: output, shape index: {}]
  %s5 = sld [smem:[#allocation0]]
  $region42: #{tpu_custom_call.1} parent=0
    _
  %s7 = ssub.s32 1, %s5
  %s8 = scalar_select 0, %s7, %s5
  $region1: #{tpu_custom_call.1} parent=0
    #allocation2 [shape = 'u8[12288]{0}', space=vmem, size = 0x3000, scoped, tag = 'input window, operand 0, single buffered']
    #allocation3 [shape = 's32[1]{0}', space=sflag, size = 0x4, scoped, tag = 'scoped memory for tpu_custom_call.1']
    #allocation4 [shape = 's32[1]{0}', space=sflag, size = 0x4, scoped, tag = 'scoped memory for tpu_custom_call.1']
    #allocation5 [shape = 'u8[163840]{0}', space=vmem, size = 0x28000, scoped, tag = 'input window, operand 1, single buffered']
    #allocation6 [shape = 's32[1]{0}', space=sflag, size = 0x4, scoped, tag = 'scoped memory for tpu_custom_call.1']
    #allocation7 [shape = 'u8[8192]{0}', space=vmem, size = 0x2000, scoped, tag = 'input window, operand 2, single buffered']
    #allocation8 [shape = 'u8[8192]{0}', space=vmem, size = 0x2000, scoped, tag = 'input window, operand 3, single buffered']
    #allocation9 [shape = 's32[1]{0}', space=sflag, size = 0x4, scoped, tag = 'scoped memory for tpu_custom_call.1']
    #allocation10 [shape = 'u8[163840]{0}', space=vmem, size = 0x28000, scoped, tag = 'output window, operand 0, single buffered']
    %9 = vsyncpa [#allocation3], 0
    %10 = vsyncpa [#allocation6], 0
    %11 = vsyncpa [#allocation9], 0
    %12 = vsyncpa [#allocation4], 0
    // Predicated region
    $region2: #{tpu_custom_call.1} parent=1 // pred_check
      _
    $region3: #{tpu_custom_call.1} parent=1 // pred_check_branch
      %14 = sbr.rel (0) target = $region5
    $region4: #{tpu_custom_call.1} parent=1 // pred_region
      %s16 = ssub.s32 384, 384
      %17 = vsyncadd [#allocation3], %s16
      %s18 = sshll.u32 [#allocation2], 4
      %s19 = int_to_ptr.vmem [resolvable:$true] %s18
      %24 = dma.hbm_to_vmem [thread:$0]  %s0, 384, %s19, [#allocation3], 128, 128, 8
    $region5: #{tpu_custom_call.1} parent=1 // pred_fallthru
      _
    // Predicated region
    $region6: #{tpu_custom_call.1} parent=1 // pred_check
      _
    $region7: #{tpu_custom_call.1} parent=1 // pred_check_branch
      %26 = sbr.rel (0) target = $region9
    $region8: #{tpu_custom_call.1} parent=1 // pred_region
      %s28 = ssub.s32 5120, 5120
      %29 = vsyncadd [#allocation6], %s28
      %s30 = sshll.u32 [#allocation5], 4
      %s31 = int_to_ptr.vmem [resolvable:$true] %s30
      %36 = dma.hbm_to_vmem [thread:$0]  %s1, 5120, %s31, [#allocation6], 128, 128, 8
    $region9: #{tpu_custom_call.1} parent=1 // pred_fallthru
      _
    // Predicated region
    $region10: #{tpu_custom_call.1} parent=1 // pred_check
      _
    $region11: #{tpu_custom_call.1} parent=1 // pred_check_branch
      %38 = sbr.rel (0) target = $region13
    $region12: #{tpu_custom_call.1} parent=1 // pred_region
      %s40 = ssub.s32 256, 256
      %41 = vsyncadd [#allocation6], %s40
      %s42 = sshll.u32 [#allocation7], 4
      %s43 = int_to_ptr.vmem [resolvable:$true] %s42
      %48 = dma.hbm_to_vmem [thread:$0]  %s2, 256, %s43, [#allocation6], 128, 128, 8
    $region13: #{tpu_custom_call.1} parent=1 // pred_fallthru
      _
    // Predicated region
    $region14: #{tpu_custom_call.1} parent=1 // pred_check
      _
    $region15: #{tpu_custom_call.1} parent=1 // pred_check_branch
      %50 = sbr.rel (0) target = $region17
    $region16: #{tpu_custom_call.1} parent=1 // pred_region
      %s52 = ssub.s32 256, 256
      %53 = vsyncadd [#allocation9], %s52
      %s54 = sshll.u32 [#allocation8], 4
      %s55 = int_to_ptr.vmem [resolvable:$true] %s54
      %60 = dma.hbm_to_vmem [thread:$0]  %s3, 256, %s55, [#allocation9], 128, 128, 8
    $region17: #{tpu_custom_call.1} parent=1 // pred_fallthru
      _
    // Predicated region
    $region18: #{tpu_custom_call.1} parent=1 // pred_check
      _
    $region19: #{tpu_custom_call.1} parent=1 // pred_check_branch
      %62 = sbr.rel (0) target = $region21
    $region20: #{tpu_custom_call.1} parent=1 // pred_region
      %63 = dma.done [#allocation3], 384
    $region21: #{tpu_custom_call.1} parent=1 // pred_fallthru
      _
    // Predicated region
    $region22: #{tpu_custom_call.1} parent=1 // pred_check
      _
    $region23: #{tpu_custom_call.1} parent=1 // pred_check_branch
      %65 = sbr.rel (0) target = $region25
    $region24: #{tpu_custom_call.1} parent=1 // pred_region
      %66 = dma.done [#allocation6], 5120
    $region25: #{tpu_custom_call.1} parent=1 // pred_fallthru
      _
    // Predicated region
    $region26: #{tpu_custom_call.1} parent=1 // pred_check
      _
    $region27: #{tpu_custom_call.1} parent=1 // pred_check_branch
      %68 = sbr.rel (0) target = $region29
    $region28: #{tpu_custom_call.1} parent=1 // pred_region
      %69 = dma.done [#allocation6], 256
    $region29: #{tpu_custom_call.1} parent=1 // pred_fallthru
      _
    // Predicated region
    $region30: #{tpu_custom_call.1} parent=1 // pred_check
      _
    $region31: #{tpu_custom_call.1} parent=1 // pred_check_branch
      %71 = sbr.rel (0) target = $region33
    $region32: #{tpu_custom_call.1} parent=1 // pred_region
      %72 = dma.done [#allocation9], 256
    $region33: #{tpu_custom_call.1} parent=1 // pred_fallthru
      _
    %v73 = vld [vmem:[#allocation2] sm:$0xff]
    %v74 = vld [vmem:[#allocation2 + $0x8] sm:$0xff]
    %v75 = vld [vmem:[#allocation2 + $0x10] sm:$0xf]
    %v76 = vxor.u32 %v73, 2147483648
    %v77 = vxor.u32 %v74, 2147483648
    %v78 = vxor.u32 %v75, 2147483648
    %v79 = vmul.f32 %v76, 1.442695
    %v80 = vpow.pop %v79
    %v81 = vmul.f32 %v77, 1.442695
    %v82 = vpow.pop %v81
    %v83 = vmul.f32 %v78, 1.442695
    %v84 = vpow.pop %v83
    %v85 = vadd.f32 %v80, 1.0
    %v86 = vadd.f32 %v82, 1.0
    %v87 = vadd.f32 %v84, 1.0
    %v88 = vrcp.pop %v85
    %v89 = vmul.f32 1.0, %v88
    %v90 = vrcp.pop %v86
    %v91 = vmul.f32 1.0, %v90
    %v92 = vrcp.pop %v87
    %v93 = vmul.f32 1.0, %v92
    %v94 = vmul.f32 %v73, %v89
    %v95 = vmul.f32 %v74, %v91
    %v96 = vmul.f32 %v75, %v93
    %v100 = vcombine.high %v94, %v94
    %v102 = vunpack.c.l.s4 1966171168
    %v103 = vunpack.c.0.s8 %v102
    %v104 = vlaneseq
    %v105 = vshrl.u32 %v104, 7
    %v106 = vsub.s32 %v103, %v105
    %v107 = vrot.slane %v94, %v106
    %v109 = vunpack.c.l.s4 1966171168
    %v110 = vunpack.c.0.s8 %v109
    %v111 = vlaneseq
    %v112 = vshrl.u32 %v111, 7
    %v113 = vsub.s32 %v110, %v112
    %v114 = vrot.slane %v100, %v113
    %v115 = vcombine.high %v107, %v107
    %v116 = vcombine.high %v114, %v114
    %v118 = vunpack.c.l.s4 1966171168
    %v119 = vunpack.c.0.s8 %v118
    %v120 = vlaneseq
    %v121 = vshrl.u32 %v120, 7
    %v122 = vsub.s32 %v119, %v121
    %v123 = vrot.slane %v107, %v122
    %v125 = vunpack.c.l.s4 1966171168
    %v126 = vunpack.c.0.s8 %v125
    %v127 = vlaneseq
    %v128 = vshrl.u32 %v127, 7
    %v129 = vsub.s32 %v126, %v128
    %v130 = vrot.slane %v114, %v129
    %v132 = vunpack.c.l.s4 1966171168
    %v133 = vunpack.c.0.s8 %v132
    %v134 = vlaneseq
    %v135 = vshrl.u32 %v134, 7
    %v136 = vsub.s32 %v133, %v135
    %v137 = vrot.slane %v115, %v136
    %v139 = vunpack.c.l.s4 1966171168
    %v140 = vunpack.c.0.s8 %v139
    %v141 = vlaneseq
    %v142 = vshrl.u32 %v141, 7
    %v143 = vsub.s32 %v140, %v142
    %v144 = vrot.slane %v116, %v143
    %v145 = vcombine.high %v123, %v123
    %v146 = vcombine.high %v130, %v130
    %v147 = vcombine.high %v137, %v137
    %v148 = vcombine.high %v144, %v144
    %v149 = vcombine.high %v95, %v95
    %v151 = vunpack.c.l.s4 1966171168
    %v152 = vunpack.c.0.s8 %v151
    %v153 = vlaneseq
    %v154 = vshrl.u32 %v153, 7
    %v155 = vsub.s32 %v152, %v154
    %v156 = vrot.slane %v95, %v155
    %v158 = vunpack.c.l.s4 1966171168
    %v159 = vunpack.c.0.s8 %v158
    %v160 = vlaneseq
    %v161 = vshrl.u32 %v160, 7
    %v162 = vsub.s32 %v159, %v161
    %v163 = vrot.slane %v149, %v162
    %v164 = vcombine.high %v156, %v156
    %v165 = vcombine.high %v163, %v163
    %v167 = vunpack.c.l.s4 1966171168
    %v168 = vunpack.c.0.s8 %v167
    %v169 = vlaneseq
    %v170 = vshrl.u32 %v169, 7
    %v171 = vsub.s32 %v168, %v170
    %v172 = vrot.slane %v156, %v171
    %v174 = vunpack.c.l.s4 1966171168
    %v175 = vunpack.c.0.s8 %v174
    %v176 = vlaneseq
    %v177 = vshrl.u32 %v176, 7
    %v178 = vsub.s32 %v175, %v177
    %v179 = vrot.slane %v163, %v178
    %v181 = vunpack.c.l.s4 1966171168
    %v182 = vunpack.c.0.s8 %v181
    %v183 = vlaneseq
    %v184 = vshrl.u32 %v183, 7
    %v185 = vsub.s32 %v182, %v184
    %v186 = vrot.slane %v164, %v185
    %v188 = vunpack.c.l.s4 1966171168
    %v189 = vunpack.c.0.s8 %v188
    %v190 = vlaneseq
    %v191 = vshrl.u32 %v190, 7
    %v192 = vsub.s32 %v189, %v191
    %v193 = vrot.slane %v165, %v192
    %v194 = vcombine.high %v172, %v172
    %v195 = vcombine.high %v179, %v179
    %v196 = vcombine.high %v186, %v186
    %v197 = vcombine.high %v193, %v193
    %v199 = vunpack.c.l.s4 1966171168
    %v200 = vunpack.c.0.s8 %v199
    %v201 = vlaneseq
    %v202 = vshrl.u32 %v201, 7
    %v203 = vsub.s32 %v200, %v202
    %v204 = vrot.slane %v96, %v203
    %v205 = vcombine.high %v204, %v204
    %v207 = vunpack.c.l.s4 1966171168
    %v208 = vunpack.c.0.s8 %v207
    %v209 = vlaneseq
    %v210 = vshrl.u32 %v209, 7
    %v211 = vsub.s32 %v208, %v210
    %v212 = vrot.slane %v204, %v211
    %v214 = vunpack.c.l.s4 1966171168
    %v215 = vunpack.c.0.s8 %v214
    %v216 = vlaneseq
    %v217 = vshrl.u32 %v216, 7
    %v218 = vsub.s32 %v215, %v217
    %v219 = vrot.slane %v205, %v218
    %v220 = vcombine.high %v212, %v212
    %v221 = vcombine.high %v219, %v219
    %v222 = vld [vmem:[#allocation7] sm:$0xff]
    %v223 = vld [vmem:[#allocation7 + $0x8] sm:$0xff]
    %v224 = vlaneseq
    %v225 = vshrl.u32 %v224, 7
    %v226 = vsub.s32 0, %v225
    %v227 = vrot.slane %v123, %v226
    %v228 = vlaneseq
    %v229 = vshrl.u32 %v228, 7
    %v230 = vsub.s32 0, %v229
    %v231 = vrot.slane %v137, %v230
    %v232 = vlaneseq
    %v233 = vshrl.u32 %v232, 7
    %v234 = vsub.s32 0, %v233
    %v235 = vrot.slane %v145, %v234
    %v236 = vlaneseq
    %v237 = vshrl.u32 %v236, 7
    %v238 = vsub.s32 0, %v237
    %v239 = vrot.slane %v147, %v238
    %v240 = vlaneseq
    %v241 = vshrl.u32 %v240, 7
    %v242 = vsub.s32 0, %v241
    %v243 = vrot.slane %v130, %v242
    %v244 = vlaneseq
    %v245 = vshrl.u32 %v244, 7
    %v246 = vsub.s32 0, %v245
    %v247 = vrot.slane %v144, %v246
    %v248 = vlaneseq
    %v249 = vshrl.u32 %v248, 7
    %v250 = vsub.s32 0, %v249
    %v251 = vrot.slane %v146, %v250
    %v252 = vlaneseq
    %v253 = vshrl.u32 %v252, 7
    %v254 = vsub.s32 0, %v253
    %v255 = vrot.slane %v148, %v254
    %v256 = vlaneseq
    %v257 = vshrl.u32 %v256, 7
    %v258 = vsub.s32 0, %v257
    %v259 = vrot.slane %v172, %v258
    %v260 = vlaneseq
    %v261 = vshrl.u32 %v260, 7
    %v262 = vsub.s32 0, %v261
    %v263 = vrot.slane %v186, %v262
    %v264 = vlaneseq
    %v265 = vshrl.u32 %v264, 7
    %v266 = vsub.s32 0, %v265
    %v267 = vrot.slane %v194, %v266
    %v268 = vlaneseq
    %v269 = vshrl.u32 %v268, 7
    %v270 = vsub.s32 0, %v269
    %v271 = vrot.slane %v196, %v270
    %v272 = vlaneseq
    %v273 = vshrl.u32 %v272, 7
    %v274 = vsub.s32 0, %v273
    %v275 = vrot.slane %v179, %v274
    %v276 = vlaneseq
    %v277 = vshrl.u32 %v276, 7
    %v278 = vsub.s32 0, %v277
    %v279 = vrot.slane %v193, %v278
    %v280 = vlaneseq
    %v281 = vshrl.u32 %v280, 7
    %v282 = vsub.s32 0, %v281
    %v283 = vrot.slane %v195, %v282
    %v284 = vlaneseq
    %v285 = vshrl.u32 %v284, 7
    %v286 = vsub.s32 0, %v285
    %v287 = vrot.slane %v197, %v286
    %v288 = vlaneseq
    %v289 = vshrl.u32 %v288, 7
    %v290 = vsub.s32 0, %v289
    %v291 = vrot.slane %v212, %v290
    %v292 = vlaneseq
    %v293 = vshrl.u32 %v292, 7
    %v294 = vsub.s32 0, %v293
    %v295 = vrot.slane %v219, %v294
    %v296 = vlaneseq
    %v297 = vshrl.u32 %v296, 7
    %v298 = vsub.s32 0, %v297
    %v299 = vrot.slane %v220, %v298
    %v300 = vlaneseq
    %v301 = vshrl.u32 %v300, 7
    %v302 = vsub.s32 0, %v301
    %v303 = vrot.slane %v221, %v302
    %v324 = vmul.f32 %v227, %v222
    %v325 = vmul.f32 %v227, %v223
    %v326 = vmul.f32 %v231, %v222
    %v327 = vmul.f32 %v231, %v223
    %v328 = vmul.f32 %v235, %v222
    %v329 = vmul.f32 %v235, %v223
    %v330 = vmul.f32 %v239, %v222
    %v331 = vmul.f32 %v239, %v223
    %v332 = vmul.f32 %v243, %v222
    %v333 = vmul.f32 %v243, %v223
    %v334 = vmul.f32 %v247, %v222
    %v335 = vmul.f32 %v247, %v223
    %v336 = vmul.f32 %v251, %v222
    %v337 = vmul.f32 %v251, %v223
    %v338 = vmul.f32 %v255, %v222
    %v339 = vmul.f32 %v255, %v223
    %v340 = vmul.f32 %v259, %v222
    %v341 = vmul.f32 %v259, %v223
    %v342 = vmul.f32 %v263, %v222
    %v343 = vmul.f32 %v263, %v223
    %v344 = vmul.f32 %v267, %v222
    %v345 = vmul.f32 %v267, %v223
    %v346 = vmul.f32 %v271, %v222
    %v347 = vmul.f32 %v271, %v223
    %v348 = vmul.f32 %v275, %v222
    %v349 = vmul.f32 %v275, %v223
    %v350 = vmul.f32 %v279, %v222
    %v351 = vmul.f32 %v279, %v223
    %v352 = vmul.f32 %v283, %v222
    %v353 = vmul.f32 %v283, %v223
    %v354 = vmul.f32 %v287, %v222
    %v355 = vmul.f32 %v287, %v223
    %v356 = vmul.f32 %v291, %v222
    %v357 = vmul.f32 %v291, %v223
    %v358 = vmul.f32 %v295, %v222
    %v359 = vmul.f32 %v295, %v223
    %v360 = vmul.f32 %v299, %v222
    %v361 = vmul.f32 %v299, %v223
    %v362 = vmul.f32 %v303, %v222
    %v363 = vmul.f32 %v303, %v223
    %v364 = vld [vmem:[#allocation8] sm:$0xff]
    %v365 = vld [vmem:[#allocation8 + $0x8] sm:$0xff]
    %v366 = vld [vmem:[#allocation5] sm:$0xff]
    %v367 = vld [vmem:[#allocation5 + $0x8] sm:$0xff]
    %v368 = vld [vmem:[#allocation5 + $0x10] sm:$0xff]
    %v369 = vld [vmem:[#allocation5 + $0x18] sm:$0xff]
    %v370 = vld [vmem:[#allocation5 + $0x20] sm:$0xff]
    %v371 = vld [vmem:[#allocation5 + $0x28] sm:$0xff]
    %v372 = vld [vmem:[#allocation5 + $0x30] sm:$0xff]
    %v373 = vld [vmem:[#allocation5 + $0x38] sm:$0xff]
    %v374 = vld [vmem:[#allocation5 + $0x40] sm:$0xff]
    %v375 = vld [vmem:[#allocation5 + $0x48] sm:$0xff]
    %v376 = vld [vmem:[#allocation5 + $0x50] sm:$0xff]
    %v377 = vld [vmem:[#allocation5 + $0x58] sm:$0xff]
    %v378 = vld [vmem:[#allocation5 + $0x60] sm:$0xff]
    %v379 = vld [vmem:[#allocation5 + $0x68] sm:$0xff]
    %v380 = vld [vmem:[#allocation5 + $0x70] sm:$0xff]
    %v381 = vld [vmem:[#allocation5 + $0x78] sm:$0xff]
    %v382 = vld [vmem:[#allocation5 + $0x80] sm:$0xff]
    %v383 = vld [vmem:[#allocation5 + $0x88] sm:$0xff]
    %v384 = vld [vmem:[#allocation5 + $0x90] sm:$0xff]
    %v385 = vld [vmem:[#allocation5 + $0x98] sm:$0xff]
    %v386 = vld [vmem:[#allocation5 + $0xa0] sm:$0xff]
    %v387 = vld [vmem:[#allocation5 + $0xa8] sm:$0xff]
    %v388 = vld [vmem:[#allocation5 + $0xb0] sm:$0xff]
    %v389 = vld [vmem:[#allocation5 + $0xb8] sm:$0xff]
    %v390 = vld [vmem:[#allocation5 + $0xc0] sm:$0xff]
    %v391 = vld [vmem:[#allocation5 + $0xc8] sm:$0xff]
    %v392 = vld [vmem:[#allocation5 + $0xd0] sm:$0xff]
    %v393 = vld [vmem:[#allocation5 + $0xd8] sm:$0xff]
    %v394 = vld [vmem:[#allocation5 + $0xe0] sm:$0xff]
    %v395 = vld [vmem:[#allocation5 + $0xe8] sm:$0xff]
    %v396 = vld [vmem:[#allocation5 + $0xf0] sm:$0xff]
    %v397 = vld [vmem:[#allocation5 + $0xf8] sm:$0xff]
    %v398 = vld [vmem:[#allocation5 + $0x100] sm:$0xff]
    %v399 = vld [vmem:[#allocation5 + $0x108] sm:$0xff]
    %v400 = vld [vmem:[#allocation5 + $0x110] sm:$0xff]
    %v401 = vld [vmem:[#allocation5 + $0x118] sm:$0xff]
    %v402 = vld [vmem:[#allocation5 + $0x120] sm:$0xff]
    %v403 = vld [vmem:[#allocation5 + $0x128] sm:$0xff]
    %v404 = vld [vmem:[#allocation5 + $0x130] sm:$0xff]
    %v405 = vld [vmem:[#allocation5 + $0x138] sm:$0xff]
    %v406 = vmul.f32 %v364, %v366
    %v407 = vmul.f32 %v365, %v367
    %v408 = vmul.f32 %v364, %v368
    %v409 = vmul.f32 %v365, %v369
    %v410 = vmul.f32 %v364, %v370
    %v411 = vmul.f32 %v365, %v371
    %v412 = vmul.f32 %v364, %v372
    %v413 = vmul.f32 %v365, %v373
    %v414 = vmul.f32 %v364, %v374
    %v415 = vmul.f32 %v365, %v375
    %v416 = vmul.f32 %v364, %v376
    %v417 = vmul.f32 %v365, %v377
    %v418 = vmul.f32 %v364, %v378
    %v419 = vmul.f32 %v365, %v379
    %v420 = vmul.f32 %v364, %v380
    %v421 = vmul.f32 %v365, %v381
    %v422 = vmul.f32 %v364, %v382
    %v423 = vmul.f32 %v365, %v383
    %v424 = vmul.f32 %v364, %v384
    %v425 = vmul.f32 %v365, %v385
    %v426 = vmul.f32 %v364, %v386
    %v427 = vmul.f32 %v365, %v387
    %v428 = vmul.f32 %v364, %v388
    %v429 = vmul.f32 %v365, %v389
    %v430 = vmul.f32 %v364, %v390
    %v431 = vmul.f32 %v365, %v391
    %v432 = vmul.f32 %v364, %v392
    %v433 = vmul.f32 %v365, %v393
    %v434 = vmul.f32 %v364, %v394
    %v435 = vmul.f32 %v365, %v395
    %v436 = vmul.f32 %v364, %v396
    %v437 = vmul.f32 %v365, %v397
    %v438 = vmul.f32 %v364, %v398
    %v439 = vmul.f32 %v365, %v399
    %v440 = vmul.f32 %v364, %v400
    %v441 = vmul.f32 %v365, %v401
    %v442 = vmul.f32 %v364, %v402
    %v443 = vmul.f32 %v365, %v403
    %v444 = vmul.f32 %v364, %v404
    %v445 = vmul.f32 %v365, %v405
    %v446 = vadd.f32 %v324, %v406
    %v447 = vadd.f32 %v325, %v407
    %v448 = vadd.f32 %v326, %v408
    %v449 = vadd.f32 %v327, %v409
    %v450 = vadd.f32 %v328, %v410
    %v451 = vadd.f32 %v329, %v411
    %v452 = vadd.f32 %v330, %v412
    %v453 = vadd.f32 %v331, %v413
    %v454 = vadd.f32 %v332, %v414
    %v455 = vadd.f32 %v333, %v415
    %v456 = vadd.f32 %v334, %v416
    %v457 = vadd.f32 %v335, %v417
    %v458 = vadd.f32 %v336, %v418
    %v459 = vadd.f32 %v337, %v419
    %v460 = vadd.f32 %v338, %v420
    %v461 = vadd.f32 %v339, %v421
    %v462 = vadd.f32 %v340, %v422
    %v463 = vadd.f32 %v341, %v423
    %v464 = vadd.f32 %v342, %v424
    %v465 = vadd.f32 %v343, %v425
    %v466 = vadd.f32 %v344, %v426
    %v467 = vadd.f32 %v345, %v427
    %v468 = vadd.f32 %v346, %v428
    %v469 = vadd.f32 %v347, %v429
    %v470 = vadd.f32 %v348, %v430
    %v471 = vadd.f32 %v349, %v431
    %v472 = vadd.f32 %v350, %v432
    %v473 = vadd.f32 %v351, %v433
    %v474 = vadd.f32 %v352, %v434
    %v475 = vadd.f32 %v353, %v435
    %v476 = vadd.f32 %v354, %v436
    %v477 = vadd.f32 %v355, %v437
    %v478 = vadd.f32 %v356, %v438
    %v479 = vadd.f32 %v357, %v439
    %v480 = vadd.f32 %v358, %v440
    %v481 = vadd.f32 %v359, %v441
    %v482 = vadd.f32 %v360, %v442
    %v483 = vadd.f32 %v361, %v443
    %v484 = vadd.f32 %v362, %v444
    %v485 = vadd.f32 %v363, %v445
    %486 = vst [vmem:[#allocation10] sm:$0xff] %v446
    %487 = vst [vmem:[#allocation10 + $0x8] sm:$0xff] %v447
    %488 = vst [vmem:[#allocation10 + $0x10] sm:$0xff] %v448
    %489 = vst [vmem:[#allocation10 + $0x18] sm:$0xff] %v449
    %490 = vst [vmem:[#allocation10 + $0x20] sm:$0xff] %v450
    %491 = vst [vmem:[#allocation10 + $0x28] sm:$0xff] %v451
    %492 = vst [vmem:[#allocation10 + $0x30] sm:$0xff] %v452
    %493 = vst [vmem:[#allocation10 + $0x38] sm:$0xff] %v453
    %494 = vst [vmem:[#allocation10 + $0x40] sm:$0xff] %v454
    %495 = vst [vmem:[#allocation10 + $0x48] sm:$0xff] %v455
    %496 = vst [vmem:[#allocation10 + $0x50] sm:$0xff] %v456
    %497 = vst [vmem:[#allocation10 + $0x58] sm:$0xff] %v457
    %498 = vst [vmem:[#allocation10 + $0x60] sm:$0xff] %v458
    %499 = vst [vmem:[#allocation10 + $0x68] sm:$0xff] %v459
    %500 = vst [vmem:[#allocation10 + $0x70] sm:$0xff] %v460
    %501 = vst [vmem:[#allocation10 + $0x78] sm:$0xff] %v461
    %502 = vst [vmem:[#allocation10 + $0x80] sm:$0xff] %v462
    %503 = vst [vmem:[#allocation10 + $0x88] sm:$0xff] %v463
    %504 = vst [vmem:[#allocation10 + $0x90] sm:$0xff] %v464
    %505 = vst [vmem:[#allocation10 + $0x98] sm:$0xff] %v465
    %506 = vst [vmem:[#allocation10 + $0xa0] sm:$0xff] %v466
    %507 = vst [vmem:[#allocation10 + $0xa8] sm:$0xff] %v467
    %508 = vst [vmem:[#allocation10 + $0xb0] sm:$0xff] %v468
    %509 = vst [vmem:[#allocation10 + $0xb8] sm:$0xff] %v469
    %510 = vst [vmem:[#allocation10 + $0xc0] sm:$0xff] %v470
    %511 = vst [vmem:[#allocation10 + $0xc8] sm:$0xff] %v471
    %512 = vst [vmem:[#allocation10 + $0xd0] sm:$0xff] %v472
    %513 = vst [vmem:[#allocation10 + $0xd8] sm:$0xff] %v473
    %514 = vst [vmem:[#allocation10 + $0xe0] sm:$0xff] %v474
    %515 = vst [vmem:[#allocation10 + $0xe8] sm:$0xff] %v475
    %516 = vst [vmem:[#allocation10 + $0xf0] sm:$0xff] %v476
    %517 = vst [vmem:[#allocation10 + $0xf8] sm:$0xff] %v477
    %518 = vst [vmem:[#allocation10 + $0x100] sm:$0xff] %v478
    %519 = vst [vmem:[#allocation10 + $0x108] sm:$0xff] %v479
    %520 = vst [vmem:[#allocation10 + $0x110] sm:$0xff] %v480
    %521 = vst [vmem:[#allocation10 + $0x118] sm:$0xff] %v481
    %522 = vst [vmem:[#allocation10 + $0x120] sm:$0xff] %v482
    %523 = vst [vmem:[#allocation10 + $0x128] sm:$0xff] %v483
    %524 = vst [vmem:[#allocation10 + $0x130] sm:$0xff] %v484
    %525 = vst [vmem:[#allocation10 + $0x138] sm:$0xff] %v485
    // Predicated region
    $region34: #{tpu_custom_call.1} parent=1 // pred_check
      _
    $region35: #{tpu_custom_call.1} parent=1 // pred_check_branch
      %527 = sbr.rel (0) target = $region37
    $region36: #{tpu_custom_call.1} parent=1 // pred_region
      %s529 = ssub.s32 5120, 5120
      %530 = vsyncadd [#allocation4], %s529
      %s531 = sshll.u32 [#allocation10], 4
      %s532 = int_to_ptr.vmem [resolvable:$true] %s531
      %537 = dma.vmem_to_hbm [thread:$0]  %s532, 5120, %s4, [#allocation4], 128, 128, 8
    $region37: #{tpu_custom_call.1} parent=1 // pred_fallthru
      _
    // Predicated region
    $region38: #{tpu_custom_call.1} parent=1 // pred_check
      _
    $region39: #{tpu_custom_call.1} parent=1 // pred_check_branch
      %539 = sbr.rel (0) target = $region41
    $region40: #{tpu_custom_call.1} parent=1 // pred_region
      %540 = dma.done [#allocation4], 5120
    $region41: #{tpu_custom_call.1} parent=1 // pred_fallthru
      _
    %541 = vsyncpa [#allocation3], 1
    %542 = vsyncpa [#allocation6], 1
    %543 = vsyncpa [#allocation9], 1
    %544 = vsyncpa [#allocation4], 1

</llo_original>
